<compile_context>
chip_gen: v7x
topology: tpu7x:2x2x1
jax: 0.10.0
libtpu: 0.0.40
codegen_flags: <defaults>
</compile_context>

<pallas_src>
import functools

import jax
import jax.numpy as jnp
from jax.experimental import pallas as pl
from jax.experimental.pallas import tpu as pltpu


def _round_up(a: int, b: int) -> int:
    return ((a + b - 1) // b) * b


# ---------------------------------------------------------------------------
# Pallas kernel: one batch tile of the full readout forward.
#   bf16 MXU inputs, f32 accumulation; ReLU / final store stay f32
#   (v5e has no bf16 VPU).  Weights are VMEM-resident for the whole grid.
# ---------------------------------------------------------------------------
def _mlp_readout_kernel(x_ref, w0_ref, w1_ref, w2_ref, o_ref):
    x = x_ref[...]                                                  # bf16 (tile_n, Dp)

    # layer 0
    y = jnp.dot(x, w0_ref[...], preferred_element_type=jnp.float32)
    y = jnp.maximum(y, 0.0)

    # layer 1 (narrow to bf16 only at the MXU input boundary)
    y = jnp.dot(y.astype(jnp.bfloat16), w1_ref[...],
                preferred_element_type=jnp.float32)
    y = jnp.maximum(y, 0.0)

    # layer 2 (no activation)
    y = jnp.dot(y.astype(jnp.bfloat16), w2_ref[...],
                preferred_element_type=jnp.float32)

    o_ref[...] = y.astype(o_ref.dtype)


# ---------------------------------------------------------------------------
# One-time weight preparation (pad to lane-dense multiples of 128, cast bf16).
# Call once; keep the returned device arrays around between forwards.
# ---------------------------------------------------------------------------
def prepare_mlp_readout_weights(w0_t, w1_t, w2_t):
    """w*_t: transposed weights (in_features, out_features), f32."""
    D = w0_t.shape[0]
    D_out = w2_t.shape[1]
    D_pad = _round_up(D, 128)
    Do_pad = _round_up(D_out, 128)

    bf16 = jnp.bfloat16
    w0_p = jnp.zeros((D_pad, D_pad), bf16).at[:D, :D].set(w0_t.astype(bf16))
    w1_p = jnp.zeros((D_pad, D_pad), bf16).at[:D, :D].set(w1_t.astype(bf16))
    w2_p = jnp.zeros((D_pad, Do_pad), bf16).at[:D, :D_out].set(w2_t.astype(bf16))
    return (jax.device_put(w0_p), jax.device_put(w1_p), jax.device_put(w2_p))


# ---------------------------------------------------------------------------
# Forward wrapper: pad/cast x if needed, grid over the batch dimension.
# ---------------------------------------------------------------------------
@functools.partial(jax.jit, static_argnames=("d_out", "tile_n_max"))
def mlp_readout_forward(x, w0_p, w1_p, w2_p, *, d_out, tile_n_max=256):
    """x: (N, D) f32; w*_p: pre-padded bf16 weights from prepare_mlp_readout_weights."""
    N, D = x.shape
    D_pad = w0_p.shape[0]
    Do_pad = w2_p.shape[1]
    assert D <= D_pad and d_out <= Do_pad

    # Balanced batch tiles; grid length >= 2 and even so both v7x TensorCores
    # get work (harmless extra grid step on single-TC v5e/v6e).
    num_tiles = max(2, -(-N // tile_n_max))
    num_tiles += num_tiles % 2
    tile_n = _round_up(-(-N // num_tiles), 16)
    N_pad = tile_n * num_tiles

    bf16 = jnp.bfloat16
    if N == N_pad and D == D_pad:
        x_p = x.astype(bf16)                 # no padding copy, just the cast
    else:
        x_p = jnp.zeros((N_pad, D_pad), bf16).at[:N, :D].set(x.astype(bf16))

    # VMEM budget from actual buffer sizes (+2x headroom), clamped so it stays
    # safely below v7x's 64 MiB/TC yet can use more on v5e/v6e for large D.
    w_bytes = (2 * D_pad * D_pad + D_pad * Do_pad) * 2          # bf16, single-buffered
    io_bytes = 2 * tile_n * (D_pad * 2 + Do_pad * 4)            # double-buffered x / out
    needed = w_bytes + io_bytes
    vmem_limit = int(min(100 * 2**20, max(32 * 2**20, 2 * needed)))
    # TODO(synk): for very large D (resident weights > ~48 MiB) add a K-tiled
    # grid axis with an f32 accumulator instead of fully-resident weights.
    if needed > 96 * 2**20:
        raise ValueError("feature dim too large for resident-weight scheme")

    flops = 2 * N_pad * D_pad * (2 * D_pad + Do_pad)
    bytes_accessed = (
        2 * (x_p.size + w0_p.size + w1_p.size + w2_p.size)      # bf16 inputs
        + 4 * N_pad * Do_pad                                     # f32 output
    )

    out_padded = pl.pallas_call(
        _mlp_readout_kernel,
        out_shape=jax.ShapeDtypeStruct((N_pad, Do_pad), jnp.float32),
        grid_spec=pltpu.PrefetchScalarGridSpec(
            num_scalar_prefetch=0,
            grid=(num_tiles,),
            in_specs=[
                # x tile: double-buffered (default), streams with the grid
                pl.BlockSpec((tile_n, D_pad), lambda i: (i, 0)),
                # weights: constant block index -> single-buffer, stay resident
                pl.BlockSpec((D_pad, D_pad), lambda i: (0, 0),
                             pipeline_mode=pl.Buffered(1)),
                pl.BlockSpec((D_pad, D_pad), lambda i: (0, 0),
                             pipeline_mode=pl.Buffered(1)),
                pl.BlockSpec((D_pad, Do_pad), lambda i: (0, 0),
                             pipeline_mode=pl.Buffered(1)),
            ],
            out_specs=pl.BlockSpec((tile_n, Do_pad), lambda i: (i, 0)),
        ),
        compiler_params=pltpu.CompilerParams(
            dimension_semantics=("parallel",),
            vmem_limit_bytes=vmem_limit,
        ),
        cost_estimate=pl.CostEstimate(
            flops=flops, transcendentals=0, bytes_accessed=bytes_accessed),
    )(x_p, w0_p, w1_p, w2_p)

    return out_padded[:N, :d_out]


# ---------------------------------------------------------------------------
# Parameter construction (deterministic): BayesianLinear reparameterized sample
#   sigma = softplus(rho);  W = mu + sigma * eps   (weight shape (out, in))
# ---------------------------------------------------------------------------
def sample_bayesian_linear_weight(key, in_features, out_features):
    k_mu, k_rho, k_eps = jax.random.split(key, 3)
    mu = 0.1 * jax.random.normal(k_mu, (out_features, in_features), jnp.float32)
    rho = jnp.full((out_features, in_features), -3.0, jnp.float32) \
        + 0.01 * jax.random.normal(k_rho, (out_features, in_features), jnp.float32)
    eps = jax.random.normal(k_eps, (out_features, in_features), jnp.float32)
    sigma = jnp.log1p(jnp.exp(rho))               # softplus
    return mu + sigma * eps


def make_mlp_readout_params(key, input_dim, output_dim, L=2):
    keys = jax.random.split(key, L + 1)
    weights = [sample_bayesian_linear_weight(keys[l], input_dim, input_dim)
               for l in range(L)]
    weights.append(sample_bayesian_linear_weight(keys[L], input_dim, output_dim))
    # transpose to (in, out) so the kernel computes x @ W^T as x @ w_t
    return [w.T for w in weights]


# ---------------------------------------------------------------------------
# Pure-f32 JAX reference of the module forward (what PyTorch would compute).
# ---------------------------------------------------------------------------
def mlp_readout_ref_f32(x, w0_t, w1_t, w2_t):
    y = jnp.maximum(x @ w0_t, 0.0)
    y = jnp.maximum(y @ w1_t, 0.0)
    return y @ w2_t


if __name__ == "__main__":
    key = jax.random.PRNGKey(0)
    k_x, k_params = jax.random.split(key)

    N, input_dim, output_dim, L = 8, 32, 8, 2

    x = jax.random.normal(k_x, (N, input_dim), jnp.float32)
    w0_t, w1_t, w2_t = make_mlp_readout_params(k_params, input_dim, output_dim, L=L)

    # One-time weight prep (persistent device arrays; NOT repeated per forward).
    w0_p, w1_p, w2_p = prepare_mlp_readout_weights(w0_t, w1_t, w2_t)

    out = mlp_readout_forward(x, w0_p, w1_p, w2_p, d_out=output_dim)
    out = jax.block_until_ready(out)

    ref = mlp_readout_ref_f32(x, w0_t, w1_t, w2_t)
    assert out.shape == (N, output_dim)
    err = jnp.max(jnp.abs(out - ref))
    # bf16 MXU inputs vs. pure-f32 reference: allow bf16-level error.
    assert jnp.allclose(out, ref, atol=5e-2, rtol=5e-2), f"max abs err = {err}"

    print("KERNEL_OK")
</pallas_src>

<mosaic_0001>
module attributes {stable_mosaic.version = 11 : i64} {
  func.func @_mlp_readout_kernel(%arg0: i32, %arg1: memref<16x128xbf16, #tpu.memory_space<vmem>>, %arg2: memref<128x128xbf16, #tpu.memory_space<vmem>>, %arg3: memref<128x128xbf16, #tpu.memory_space<vmem>>, %arg4: memref<128x128xbf16, #tpu.memory_space<vmem>>, %arg5: memref<16x128xf32, #tpu.memory_space<vmem>>) attributes {dimension_semantics = [#tpu.dimension_semantics<parallel>], iteration_bounds = array<i64: 2>, scalar_prefetch = 0 : i64, scratch_operands = 0 : i64, tpu.core_type = #tpu.core_type<tc>, window_params = [{transform_indices = @transform_0, window_bounds = array<i64: 16, 128>}, {pipeline_mode = #tpu.pipeline_mode<synchronous>, transform_indices = @transform_1, window_bounds = array<i64: 128, 128>}, {pipeline_mode = #tpu.pipeline_mode<synchronous>, transform_indices = @transform_2, window_bounds = array<i64: 128, 128>}, {pipeline_mode = #tpu.pipeline_mode<synchronous>, transform_indices = @transform_3, window_bounds = array<i64: 128, 128>}, {transform_indices = @transform_4, window_bounds = array<i64: 16, 128>}]} {
    %c0 = arith.constant 0 : index
    %c0_0 = arith.constant 0 : index
    %0 = vector.load %arg1[%c0, %c0_0] : memref<16x128xbf16, #tpu.memory_space<vmem>>, vector<16x128xbf16>
    %c0_1 = arith.constant 0 : index
    %c0_2 = arith.constant 0 : index
    %1 = vector.load %arg2[%c0_1, %c0_2] : memref<128x128xbf16, #tpu.memory_space<vmem>>, vector<128x128xbf16>
    %cst = arith.constant dense<0.000000e+00> : vector<16x128xf32>
    %2 = tpu.matmul %0, %1, %cst {dimension_numbers = #tpu.dot_dimension_numbers<[1], [0], [0], [1], [0, 0, 1, 1], [], []>} : vector<16x128xbf16>, vector<128x128xbf16>, vector<16x128xf32> -> vector<16x128xf32>
    %cst_3 = arith.constant 0.000000e+00 : f32
    %3 = vector.broadcast %cst_3 : f32 to vector<16x128xf32>
    %4 = arith.maximumf %2, %3 : vector<16x128xf32>
    %5 = arith.truncf %4 : vector<16x128xf32> to vector<16x128xbf16>
    %c0_4 = arith.constant 0 : index
    %c0_5 = arith.constant 0 : index
    %6 = vector.load %arg3[%c0_4, %c0_5] : memref<128x128xbf16, #tpu.memory_space<vmem>>, vector<128x128xbf16>
    %cst_6 = arith.constant dense<0.000000e+00> : vector<16x128xf32>
    %7 = tpu.matmul %5, %6, %cst_6 {dimension_numbers = #tpu.dot_dimension_numbers<[1], [0], [0], [1], [0, 0, 1, 1], [], []>} : vector<16x128xbf16>, vector<128x128xbf16>, vector<16x128xf32> -> vector<16x128xf32>
    %cst_7 = arith.constant 0.000000e+00 : f32
    %8 = vector.broadcast %cst_7 : f32 to vector<16x128xf32>
    %9 = arith.maximumf %7, %8 : vector<16x128xf32>
    %10 = arith.truncf %9 : vector<16x128xf32> to vector<16x128xbf16>
    %c0_8 = arith.constant 0 : index
    %c0_9 = arith.constant 0 : index
    %11 = vector.load %arg4[%c0_8, %c0_9] : memref<128x128xbf16, #tpu.memory_space<vmem>>, vector<128x128xbf16>
    %cst_10 = arith.constant dense<0.000000e+00> : vector<16x128xf32>
    %12 = tpu.matmul %10, %11, %cst_10 {dimension_numbers = #tpu.dot_dimension_numbers<[1], [0], [0], [1], [0, 0, 1, 1], [], []>} : vector<16x128xbf16>, vector<128x128xbf16>, vector<16x128xf32> -> vector<16x128xf32>
    %c0_11 = arith.constant 0 : index
    %c0_12 = arith.constant 0 : index
    %13 = vector.load %arg5[%c0_11, %c0_12] : memref<16x128xf32, #tpu.memory_space<vmem>>, vector<16x128xf32>
    tpu.vector_store %arg5[%c0_11, %c0_12], %12 {strides = array<i32>} : memref<16x128xf32, #tpu.memory_space<vmem>>, vector<16x128xf32>,
    return
  }
  func.func @transform_0(%arg0: i32) -> (i32, i32) {
    %c0_i32 = arith.constant 0 : i32
    %c0_i32_0 = arith.constant 0 : i32
    return %arg0, %c0_i32 : i32, i32
  }
  func.func @transform_1(%arg0: i32) -> (i32, i32) {
    %c0_i32 = arith.constant 0 : i32
    %c0_i32_0 = arith.constant 0 : i32
    %c0_i32_1 = arith.constant 0 : i32
    return %c0_i32, %c0_i32_0 : i32, i32
  }
  func.func @transform_2(%arg0: i32) -> (i32, i32) {
    %c0_i32 = arith.constant 0 : i32
    %c0_i32_0 = arith.constant 0 : i32
    %c0_i32_1 = arith.constant 0 : i32
    return %c0_i32, %c0_i32_0 : i32, i32
  }
  func.func @transform_3(%arg0: i32) -> (i32, i32) {
    %c0_i32 = arith.constant 0 : i32
    %c0_i32_0 = arith.constant 0 : i32
    %c0_i32_1 = arith.constant 0 : i32
    return %c0_i32, %c0_i32_0 : i32, i32
  }
  func.func @transform_4(%arg0: i32) -> (i32, i32) {
    %c0_i32 = arith.constant 0 : i32
    %c0_i32_0 = arith.constant 0 : i32
    return %arg0, %c0_i32 : i32, i32
  }
}

</mosaic_0001>

<llo_original>
// kernel: mlp_readout_forward.1
$region0: #{mlp_readout_forward.1}
  #allocation0 [shape = 'u32[]', space=smem, size = 0x4, offset = 0x4, fixed_abs, tag = 'smem constant byte address 0x4 - core index']
  #allocation1 [shape = 'u32[144,128]{1,0:T(1,128)}', space=vmem, size = 0x12000, scoped, tag = 'internal scratch']
  %s0 = inlined_call_operand.vmem [shape: bf16[32,128], index: 0, kind: input, shape index: {}]
  %s1 = inlined_call_operand.hbm [shape: bf16[128,128], index: 1, kind: input, shape index: {}]
  %s2 = inlined_call_operand.hbm [shape: bf16[128,128], index: 2, kind: input, shape index: {}]
  %s3 = inlined_call_operand.hbm [shape: bf16[128,128], index: 3, kind: input, shape index: {}]
  %s4 = inlined_call_operand.vmem [shape: f32[32,128], index: 4, kind: output, shape index: {}]
  %s5 = sld [smem:[#allocation0]]
  $region61: #{mlp_readout_forward.1} parent=0
    _
  %s7 = ssub.s32 1, %s5
  %s8 = scalar_select 0, %s7, %s5
  $region1: #{mlp_readout_forward.1} parent=0
    #allocation2 [shape = 'u8[32768]{0}', space=vmem, size = 0x8000, scoped, tag = 'input window, operand 1, single buffered']
    #allocation3 [shape = 's32[2]{0}', space=sflag, size = 0x8, scoped, tag = 'scoped memory for mlp_readout_forward.1']
    #allocation4 [shape = 'u8[32768]{0}', space=vmem, size = 0x8000, scoped, tag = 'input window, operand 2, single buffered']
    #allocation5 [shape = 's32[1]{0}', space=sflag, size = 0x4, scoped, tag = 'scoped memory for mlp_readout_forward.1']
    #allocation6 [shape = 'u8[32768]{0}', space=vmem, size = 0x8000, scoped, tag = 'input window, operand 3, single buffered']
    %9 = vsyncpa [#allocation3], 0
    %10 = vsyncpa [#allocation5], 0
    loop: start=0, step=1, limit=4
    $region2: #{mlp_readout_forward.1} parent=1 // loop_pre_header
      _
    $region3: #{mlp_readout_forward.1} parent=1 // loop_header
      %s12 = sphi 0, %s16
      %p13 = scmp.ge.s32.totalorder %s12, 4
      %s22 = sphi 0, %s24
      %s25 = sphi 0, %s22
      %s26 = sphi 0, %s25
      %s42 = sphi 0, %s26
      %s46 = sphi 0, %s46
      %s48 = sphi 0, %s46
      %s49 = sphi 0, %s48
      %s63 = sphi 0, %s49
      %s67 = sphi 0, %s67
      %s69 = sphi 0, %s67
      %s70 = sphi 0, %s69
      %s84 = sphi 0, %s70
      %s88 = sphi 0, %s88
      %s90 = sphi 0, %s88
      %s91 = sphi 0, %s90
      %s105 = sphi 0, %s91
      %s111 = sphi 0, %s113
      %s114 = sphi 0, %s111
      %s115 = sphi 0, %s114
      %s131 = sphi 0, %s115
    $region4: #{mlp_readout_forward.1} parent=1 // loop_header_branch
      %15 = sbr.rel (%p13) target = $region8
    $region5: #{mlp_readout_forward.1} parent=1 // loop_body
      %s17 = ssub.s32 %s12, 1
      %s18 = ssub.s32 %s12, 2
      %s19 = sadd.s32 %s12, 1
      %s20 = ssub.s32 %s12, %s19
      %p21 = scmp.eq.s32.totalorder %s20, 0
      %s23 = sadd.s32 %s22, 1
      %s24 = scalar_select %p21, %s22, %s23
      %p27 = pneg %p21
      %p28 = scmp.eq.s32.totalorder %s12, 1
      %p29 = por %p27, %p28
      %p30 = scmp.ne.s32.totalorder %s22, %s25
      %p31 = scmp.eq.s32.totalorder %s12, 0
      %p32 = por %p30, %p31
      %p33 = scmp.ne.s32.totalorder %s22, %s25
      %p34 = scmp.eq.s32.totalorder %s17, 1
      %p35 = por %p33, %p34
      %p36 = scmp.ne.s32.totalorder %s25, %s26
      %p37 = scmp.eq.s32.totalorder %s17, 0
      %p38 = por %p36, %p37
      %p39 = scmp.ne.s32.totalorder %s25, %s26
      %p40 = scmp.eq.s32.totalorder %s18, 1
      %p41 = por %p39, %p40
      %p43 = scmp.ne.s32.totalorder %s26, %s42
      %p44 = scmp.eq.s32.totalorder %s18, 0
      %p45 = por %p43, %p44
      %s47 = sadd.s32 %s46, 1
      %p50 = scmp.eq.s32.totalorder %s12, 1
      %p51 = scmp.ne.s32.totalorder %s46, %s48
      %p52 = scmp.eq.s32.totalorder %s12, 0
      %p53 = por %p51, %p52
      %p54 = scmp.ne.s32.totalorder %s46, %s48
      %p55 = scmp.eq.s32.totalorder %s17, 1
      %p56 = por %p54, %p55
      %p57 = scmp.ne.s32.totalorder %s48, %s49
      %p58 = scmp.eq.s32.totalorder %s17, 0
      %p59 = por %p57, %p58
      %p60 = scmp.ne.s32.totalorder %s48, %s49
      %p61 = scmp.eq.s32.totalorder %s18, 1
      %p62 = por %p60, %p61
      %p64 = scmp.ne.s32.totalorder %s49, %s63
      %p65 = scmp.eq.s32.totalorder %s18, 0
      %p66 = por %p64, %p65
      %s68 = sadd.s32 %s67, 1
      %p71 = scmp.eq.s32.totalorder %s12, 1
      %p72 = scmp.ne.s32.totalorder %s67, %s69
      %p73 = scmp.eq.s32.totalorder %s12, 0
      %p74 = por %p72, %p73
      %p75 = scmp.ne.s32.totalorder %s67, %s69
      %p76 = scmp.eq.s32.totalorder %s17, 1
      %p77 = por %p75, %p76
      %p78 = scmp.ne.s32.totalorder %s69, %s70
      %p79 = scmp.eq.s32.totalorder %s17, 0
      %p80 = por %p78, %p79
      %p81 = scmp.ne.s32.totalorder %s69, %s70
      %p82 = scmp.eq.s32.totalorder %s18, 1
      %p83 = por %p81, %p82
      %p85 = scmp.ne.s32.totalorder %s70, %s84
      %p86 = scmp.eq.s32.totalorder %s18, 0
      %p87 = por %p85, %p86
      %s89 = sadd.s32 %s88, 1
      %p92 = scmp.eq.s32.totalorder %s12, 1
      %p93 = scmp.ne.s32.totalorder %s88, %s90
      %p94 = scmp.eq.s32.totalorder %s12, 0
      %p95 = por %p93, %p94
      %p96 = scmp.ne.s32.totalorder %s88, %s90
      %p97 = scmp.eq.s32.totalorder %s17, 1
      %p98 = por %p96, %p97
      %p99 = scmp.ne.s32.totalorder %s90, %s91
      %p100 = scmp.eq.s32.totalorder %s17, 0
      %p101 = por %p99, %p100
      %p102 = scmp.ne.s32.totalorder %s90, %s91
      %p103 = scmp.eq.s32.totalorder %s18, 1
      %p104 = por %p102, %p103
      %p106 = scmp.ne.s32.totalorder %s91, %s105
      %p107 = scmp.eq.s32.totalorder %s18, 0
      %p108 = por %p106, %p107
      %s109 = ssub.s32 %s12, %s19
      %p110 = scmp.eq.s32.totalorder %s109, 0
      %s112 = sadd.s32 %s111, 1
      %s113 = scalar_select %p110, %s111, %s112
      %p116 = pneg %p110
      %p117 = scmp.eq.s32.totalorder %s12, 1
      %p118 = por %p116, %p117
      %p119 = scmp.ne.s32.totalorder %s111, %s114
      %p120 = scmp.eq.s32.totalorder %s12, 0
      %p121 = por %p119, %p120
      %p122 = scmp.ne.s32.totalorder %s111, %s114
      %p123 = scmp.eq.s32.totalorder %s17, 1
      %p124 = por %p122, %p123
      %p125 = scmp.ne.s32.totalorder %s114, %s115
      %p126 = scmp.eq.s32.totalorder %s17, 0
      %p127 = por %p125, %p126
      %p128 = scmp.ne.s32.totalorder %s114, %s115
      %p129 = scmp.eq.s32.totalorder %s18, 1
      %p130 = por %p128, %p129
      %p132 = scmp.ne.s32.totalorder %s115, %s131
      %p133 = scmp.eq.s32.totalorder %s18, 0
      %p134 = por %p132, %p133
      %p135 = scmp.le.s32.totalorder 1, %s12
      %p136 = scmp.lt.s32.totalorder %s12, 3
      %p137 = pnand %p135, %p136
      %p138 = pneg %p137
      // Predicated region
      $region9: #{mlp_readout_forward.1} parent=5 // pred_check
        _
      $region10: #{mlp_readout_forward.1} parent=5 // pred_check_branch
        %140 = sbr.rel (%p137) target = $region12
      $region11: #{mlp_readout_forward.1} parent=5 // pred_region
        %s141 = ssub.s32 %s12, 1
        // Predicated region
        $region13: #{mlp_readout_forward.1} parent=11 // pred_check
          %p142 = pneg %p59
        $region14: #{mlp_readout_forward.1} parent=11 // pred_check_branch
          %144 = sbr.rel (%p142) target = $region16
        $region15: #{mlp_readout_forward.1} parent=11 // pred_region
          %s146 = ssub.s32 1024, 1024
          %147 = vsyncadd [#allocation3], %s146
          %s148 = sshll.u32 [#allocation2], 4
          %s149 = int_to_ptr.vmem [resolvable:$true] %s148
          %154 = dma.hbm_to_vmem [thread:$0]  %s1, 1024, %s149, [#allocation3], 64, 64, 4
        $region16: #{mlp_readout_forward.1} parent=11 // pred_fallthru
          _
        // Predicated region
        $region17: #{mlp_readout_forward.1} parent=11 // pred_check
          %p155 = pneg %p80
        $region18: #{mlp_readout_forward.1} parent=11 // pred_check_branch
          %157 = sbr.rel (%p155) target = $region20
        $region19: #{mlp_readout_forward.1} parent=11 // pred_region
          %s159 = ssub.s32 1024, 1024
          %160 = vsyncadd [#allocation5], %s159
          %s161 = sshll.u32 [#allocation4], 4
          %s162 = int_to_ptr.vmem [resolvable:$true] %s161
          %167 = dma.hbm_to_vmem [thread:$0]  %s2, 1024, %s162, [#allocation5], 64, 64, 4
        $region20: #{mlp_readout_forward.1} parent=11 // pred_fallthru
          _
        // Predicated region
        $region21: #{mlp_readout_forward.1} parent=11 // pred_check
          %p168 = pneg %p101
        $region22: #{mlp_readout_forward.1} parent=11 // pred_check_branch
          %170 = sbr.rel (%p168) target = $region24
        $region23: #{mlp_readout_forward.1} parent=11 // pred_region
          %s172 = ssub.s32 1024, 1024
          %173 = vsyncadd [#allocation5], %s172
          %s174 = sshll.u32 [#allocation6], 4
          %s175 = int_to_ptr.vmem [resolvable:$true] %s174
          %180 = dma.hbm_to_vmem [thread:$0]  %s3, 1024, %s175, [#allocation5], 64, 64, 4
        $region24: #{mlp_readout_forward.1} parent=11 // pred_fallthru
          _
      $region12: #{mlp_readout_forward.1} parent=5 // pred_fallthru
        _
      %p181 = scmp.lt.s32.totalorder %s12, 2
      // Predicated region
      $region25: #{mlp_readout_forward.1} parent=5 // pred_check
        %p182 = pneg %p181
      $region26: #{mlp_readout_forward.1} parent=5 // pred_check_branch
        %184 = sbr.rel (%p182) target = $region28
      $region27: #{mlp_readout_forward.1} parent=5 // pred_region
        // Predicated region
        $region29: #{mlp_readout_forward.1} parent=27 // pred_check
          %p185 = pneg %p32
        $region30: #{mlp_readout_forward.1} parent=27 // pred_check_branch
          %187 = sbr.rel (%p185) target = $region32
        $region31: #{mlp_readout_forward.1} parent=27 // pred_region
          %s188 = smul.u32 2, %s12
          %p189 = scmp.lt.s32.totalorder %s188, 3
          %s190 = scalar_select %p189, %s188, 3
          %s191 = smul.addr %s190, 4
          %s192 = scalar_lea.vmem %s0, %s191
          %s193 = smul.u32 2, %s12
        $region32: #{mlp_readout_forward.1} parent=27 // pred_fallthru
          _
      $region28: #{mlp_readout_forward.1} parent=5 // pred_fallthru
        _
      %p194 = scmp.le.s32.totalorder 1, %s12
      %p195 = scmp.lt.s32.totalorder %s12, 3
      %p196 = pnand %p194, %p195
      %p197 = pneg %p196
      // Predicated region
      $region33: #{mlp_readout_forward.1} parent=5 // pred_check
        _
      $region34: #{mlp_readout_forward.1} parent=5 // pred_check_branch
        %199 = sbr.rel (%p196) target = $region36
      $region35: #{mlp_readout_forward.1} parent=5 // pred_region
        %s200 = ssub.s32 %s12, 1
        // Predicated region
        $region37: #{mlp_readout_forward.1} parent=35 // pred_check
          %p201 = pneg %p59
        $region38: #{mlp_readout_forward.1} parent=35 // pred_check_branch
          %203 = sbr.rel (%p201) target = $region40
        $region39: #{mlp_readout_forward.1} parent=35 // pred_region
          %204 = dma.done [#allocation3], 1024
        $region40: #{mlp_readout_forward.1} parent=35 // pred_fallthru
          _
        // Predicated region
        $region41: #{mlp_readout_forward.1} parent=35 // pred_check
          %p205 = pneg %p80
        $region42: #{mlp_readout_forward.1} parent=35 // pred_check_branch
          %207 = sbr.rel (%p205) target = $region44
        $region43: #{mlp_readout_forward.1} parent=35 // pred_region
          %208 = dma.done [#allocation5], 1024
        $region44: #{mlp_readout_forward.1} parent=35 // pred_fallthru
          _
        // Predicated region
        $region45: #{mlp_readout_forward.1} parent=35 // pred_check
          %p209 = pneg %p101
        $region46: #{mlp_readout_forward.1} parent=35 // pred_check_branch
          %211 = sbr.rel (%p209) target = $region48
        $region47: #{mlp_readout_forward.1} parent=35 // pred_region
          %212 = dma.done [#allocation5], 1024
        $region48: #{mlp_readout_forward.1} parent=35 // pred_fallthru
          _
        %s213 = smul.u32 2, %s17
        %p214 = scmp.lt.s32.totalorder %s213, 3
        %s215 = scalar_select %p214, %s213, 3
        %s216 = smul.addr %s215, 4
        %s217 = scalar_lea.vmem %s0, %s216
        %p218 = pneg %p38
        %p219 = pneg %p35
        %p220 = pneg %p59
        %p221 = pneg %p56
        %p222 = pneg %p80
        %p223 = pneg %p77
        %p224 = pneg %p101
        %p225 = pneg %p98
        %p226 = pneg %p127
        %p227 = pneg %p124
        %s228 = smul.u32 2, %s17
        %p229 = scmp.lt.s32.totalorder %s228, 3
        %s230 = scalar_select %p229, %s228, 3
        %s231 = smul.addr %s230, 8
        %s232 = scalar_lea.vmem %s4, %s231
        %s233 = smul.u32 2, %s17
        %p234 = scmp.lt.s32.totalorder %s233, 3
        %s235 = scalar_select %p234, %s233, 3
        %s236 = smul.addr %s235, 4
        %s237 = scalar_lea.vmem %s0, %s236
        %s238 = smul.u32 2, %s17
        %s239 = smul.u32 2, %s17
        %p240 = scmp.lt.s32.totalorder %s239, 3
        %s241 = scalar_select %p240, %s239, 3
        %s242 = smul.addr %s241, 8
        %s243 = scalar_lea.vmem %s4, %s242
        %s244 = smul.u32 2, %s17
        %v246 = vld [vmem:[%s237] sm:$0xf]
        %v247 = vld [vmem:[%s237 + $0x4] sm:$0xf]
        %v248 = vld [vmem:[#allocation2] sm:$0xf]
        %v249 = vld [vmem:[#allocation2 + $0x4] sm:$0xf]
        %v250 = vld [vmem:[#allocation2 + $0x8] sm:$0xf]
        %v251 = vld [vmem:[#allocation2 + $0xc] sm:$0xf]
        %v252 = vld [vmem:[#allocation2 + $0x10] sm:$0xf]
        %v253 = vld [vmem:[#allocation2 + $0x14] sm:$0xf]
        %v254 = vld [vmem:[#allocation2 + $0x18] sm:$0xf]
        %v255 = vld [vmem:[#allocation2 + $0x1c] sm:$0xf]
        %v256 = vld [vmem:[#allocation2 + $0x20] sm:$0xf]
        %v257 = vld [vmem:[#allocation2 + $0x24] sm:$0xf]
        %v258 = vld [vmem:[#allocation2 + $0x28] sm:$0xf]
        %v259 = vld [vmem:[#allocation2 + $0x2c] sm:$0xf]
        %v260 = vld [vmem:[#allocation2 + $0x30] sm:$0xf]
        %v261 = vld [vmem:[#allocation2 + $0x34] sm:$0xf]
        %v262 = vld [vmem:[#allocation2 + $0x38] sm:$0xf]
        %v263 = vld [vmem:[#allocation2 + $0x3c] sm:$0xf]
        %v266 = vunpack.c.l.b16 %v246
        %v267 = vunpack.c.l.b16 %v247
        %v268 = vpack.c.b16 %v267, %v266
        %v286 = vunpack.c.l.b16 %v248
        %v287 = vunpack.c.l.b16 %v249
        %v288 = vunpack.c.l.b16 %v250
        %v289 = vunpack.c.l.b16 %v251
        %v290 = vunpack.c.l.b16 %v252
        %v291 = vunpack.c.l.b16 %v253
        %v292 = vunpack.c.l.b16 %v254
        %v293 = vunpack.c.l.b16 %v255
        %v294 = vunpack.c.l.b16 %v256
        %v295 = vunpack.c.l.b16 %v257
        %v296 = vunpack.c.l.b16 %v258
        %v297 = vunpack.c.l.b16 %v259
        %v298 = vunpack.c.l.b16 %v260
        %v299 = vunpack.c.l.b16 %v261
        %v300 = vunpack.c.l.b16 %v262
        %v301 = vunpack.c.l.b16 %v263
        %v302 = vpack.c.b16 %v287, %v286
        %v303 = vpack.c.b16 %v289, %v288
        %v304 = vpack.c.b16 %v291, %v290
        %v305 = vpack.c.b16 %v293, %v292
        %v306 = vpack.c.b16 %v295, %v294
        %v307 = vpack.c.b16 %v297, %v296
        %v308 = vpack.c.b16 %v299, %v298
        %v309 = vpack.c.b16 %v301, %v300
        %318 = vmatprep.subr.bf16.mxu0 0
        %319 = vmatpush1.bf16.msra.mxu0 %v302
        %320 = vmatprep.subr.bf16.mxu0 0
        %321 = vmatpush1.bf16.msra.mxu0 %v303
        %322 = vmatprep.subr.bf16.mxu0 0
        %323 = vmatpush1.bf16.msra.mxu0 %v304
        %324 = vmatprep.subr.bf16.mxu0 0
        %325 = vmatpush1.bf16.msra.mxu0 %v305
        %326 = vmatprep.subr.bf16.mxu0 0
        %327 = vmatpush1.bf16.msra.mxu0 %v306
        %328 = vmatprep.subr.bf16.mxu0 0
        %329 = vmatpush1.bf16.msra.mxu0 %v307
        %330 = vmatprep.subr.bf16.mxu0 0
        %331 = vmatpush1.bf16.msra.mxu0 %v308
        %332 = vmatprep.subr.bf16.mxu0 0
        %333 = vmatpush1.bf16.msra.mxu0 %v309
        %334 = vmatprep.subr.bf16.mxu0 0
        %335 = vmatpush1.bf16.msra.mxu0 0
        %336 = vmatprep.subr.bf16.mxu0 0
        %337 = vmatpush1.bf16.msra.mxu0 0
        %338 = vmatprep.subr.bf16.mxu0 0
        %339 = vmatpush1.bf16.msra.mxu0 0
        %340 = vmatprep.subr.bf16.mxu0 0
        %341 = vmatpush1.bf16.msra.mxu0 0
        %342 = vmatprep.subr.bf16.mxu0 0
        %343 = vmatpush1.bf16.msra.mxu0 0
        %344 = vmatprep.subr.bf16.mxu0 0
        %345 = vmatpush1.bf16.msra.mxu0 0
        %346 = vmatprep.subr.bf16.mxu0 0
        %347 = vmatpush1.bf16.msra.mxu0 0
        %348 = vmatprep.subr.bf16.mxu0 0
        %349 = vmatpush1.bf16.msra.mxu0 0
        %350 = vmatprep.mubr.bf16.mxu0 0
        %351 = vmatmul.mubr.bf16.gmra.mrb[0].mxu0 %v268
        %v352 = vpop.f32.mrb[0].mxu0
        %v353 = vadd.f32 0.0, %v352
        %v354 = vpop.f32.mrb[0].mxu0
        %v355 = vpop.f32.mrb[0].mxu0
        %v356 = vadd.f32 0.0, %v355
        %v357 = vpop.f32.mrb[0].mxu0
        %358 = vdwg.mxu0
        %v359 = vmax.f32 %v353, 0.0
        %v360 = vmax.f32 %v356, 0.0
        %v361 = vpack.c.bf16 %v360, %v359
        %v362 = vld [vmem:[#allocation4] sm:$0xf]
        %v363 = vld [vmem:[#allocation4 + $0x4] sm:$0xf]
        %v364 = vld [vmem:[#allocation4 + $0x8] sm:$0xf]
        %v365 = vld [vmem:[#allocation4 + $0xc] sm:$0xf]
        %v366 = vld [vmem:[#allocation4 + $0x10] sm:$0xf]
        %v367 = vld [vmem:[#allocation4 + $0x14] sm:$0xf]
        %v368 = vld [vmem:[#allocation4 + $0x18] sm:$0xf]
        %v369 = vld [vmem:[#allocation4 + $0x1c] sm:$0xf]
        %v370 = vld [vmem:[#allocation4 + $0x20] sm:$0xf]
        %v371 = vld [vmem:[#allocation4 + $0x24] sm:$0xf]
        %v372 = vld [vmem:[#allocation4 + $0x28] sm:$0xf]
        %v373 = vld [vmem:[#allocation4 + $0x2c] sm:$0xf]
        %v374 = vld [vmem:[#allocation4 + $0x30] sm:$0xf]
        %v375 = vld [vmem:[#allocation4 + $0x34] sm:$0xf]
        %v376 = vld [vmem:[#allocation4 + $0x38] sm:$0xf]
        %v377 = vld [vmem:[#allocation4 + $0x3c] sm:$0xf]
        %v394 = vunpack.c.l.b16 %v362
        %v395 = vunpack.c.l.b16 %v363
        %v396 = vunpack.c.l.b16 %v364
        %v397 = vunpack.c.l.b16 %v365
        %v398 = vunpack.c.l.b16 %v366
        %v399 = vunpack.c.l.b16 %v367
        %v400 = vunpack.c.l.b16 %v368
        %v401 = vunpack.c.l.b16 %v369
        %v402 = vunpack.c.l.b16 %v370
        %v403 = vunpack.c.l.b16 %v371
        %v404 = vunpack.c.l.b16 %v372
        %v405 = vunpack.c.l.b16 %v373
        %v406 = vunpack.c.l.b16 %v374
        %v407 = vunpack.c.l.b16 %v375
        %v408 = vunpack.c.l.b16 %v376
        %v409 = vunpack.c.l.b16 %v377
        %v410 = vpack.c.b16 %v395, %v394
        %v411 = vpack.c.b16 %v397, %v396
        %v412 = vpack.c.b16 %v399, %v398
        %v413 = vpack.c.b16 %v401, %v400
        %v414 = vpack.c.b16 %v403, %v402
        %v415 = vpack.c.b16 %v405, %v404
        %v416 = vpack.c.b16 %v407, %v406
        %v417 = vpack.c.b16 %v409, %v408
        %426 = vmatprep.subr.bf16.mxu0 0
        %427 = vmatpush1.bf16.msra.mxu0 %v410
        %428 = vmatprep.subr.bf16.mxu0 0
        %429 = vmatpush1.bf16.msra.mxu0 %v411
        %430 = vmatprep.subr.bf16.mxu0 0
        %431 = vmatpush1.bf16.msra.mxu0 %v412
        %432 = vmatprep.subr.bf16.mxu0 0
        %433 = vmatpush1.bf16.msra.mxu0 %v413
        %434 = vmatprep.subr.bf16.mxu0 0
        %435 = vmatpush1.bf16.msra.mxu0 %v414
        %436 = vmatprep.subr.bf16.mxu0 0
        %437 = vmatpush1.bf16.msra.mxu0 %v415
        %438 = vmatprep.subr.bf16.mxu0 0
        %439 = vmatpush1.bf16.msra.mxu0 %v416
        %440 = vmatprep.subr.bf16.mxu0 0
        %441 = vmatpush1.bf16.msra.mxu0 %v417
        %442 = vmatprep.subr.bf16.mxu0 0
        %443 = vmatpush1.bf16.msra.mxu0 0
        %444 = vmatprep.subr.bf16.mxu0 0
        %445 = vmatpush1.bf16.msra.mxu0 0
        %446 = vmatprep.subr.bf16.mxu0 0
        %447 = vmatpush1.bf16.msra.mxu0 0
        %448 = vmatprep.subr.bf16.mxu0 0
        %449 = vmatpush1.bf16.msra.mxu0 0
        %450 = vmatprep.subr.bf16.mxu0 0
        %451 = vmatpush1.bf16.msra.mxu0 0
        %452 = vmatprep.subr.bf16.mxu0 0
        %453 = vmatpush1.bf16.msra.mxu0 0
        %454 = vmatprep.subr.bf16.mxu0 0
        %455 = vmatpush1.bf16.msra.mxu0 0
        %456 = vmatprep.subr.bf16.mxu0 0
        %457 = vmatpush1.bf16.msra.mxu0 0
        %458 = vmatprep.mubr.bf16.mxu0 0
        %459 = vmatmul.mubr.bf16.gmra.mrb[0].mxu0 %v361
        %v460 = vpop.f32.mrb[0].mxu0
        %v461 = vadd.f32 0.0, %v460
        %v462 = vpop.f32.mrb[0].mxu0
        %v463 = vpop.f32.mrb[0].mxu0
        %v464 = vadd.f32 0.0, %v463
        %v465 = vpop.f32.mrb[0].mxu0
        %466 = vdwg.mxu0
        %v467 = vmax.f32 %v461, 0.0
        %v468 = vmax.f32 %v464, 0.0
        %v469 = vpack.c.bf16 %v468, %v467
        %v470 = vld [vmem:[#allocation6] sm:$0xf]
        %v471 = vld [vmem:[#allocation6 + $0x4] sm:$0xf]
        %v472 = vld [vmem:[#allocation6 + $0x8] sm:$0xf]
        %v473 = vld [vmem:[#allocation6 + $0xc] sm:$0xf]
        %v474 = vld [vmem:[#allocation6 + $0x10] sm:$0xf]
        %v475 = vld [vmem:[#allocation6 + $0x14] sm:$0xf]
        %v476 = vld [vmem:[#allocation6 + $0x18] sm:$0xf]
        %v477 = vld [vmem:[#allocation6 + $0x1c] sm:$0xf]
        %v478 = vld [vmem:[#allocation6 + $0x20] sm:$0xf]
        %v479 = vld [vmem:[#allocation6 + $0x24] sm:$0xf]
        %v480 = vld [vmem:[#allocation6 + $0x28] sm:$0xf]
        %v481 = vld [vmem:[#allocation6 + $0x2c] sm:$0xf]
        %v482 = vld [vmem:[#allocation6 + $0x30] sm:$0xf]
        %v483 = vld [vmem:[#allocation6 + $0x34] sm:$0xf]
        %v484 = vld [vmem:[#allocation6 + $0x38] sm:$0xf]
        %v485 = vld [vmem:[#allocation6 + $0x3c] sm:$0xf]
        %v502 = vunpack.c.l.b16 %v470
        %v503 = vunpack.c.l.b16 %v471
        %v504 = vunpack.c.l.b16 %v472
        %v505 = vunpack.c.l.b16 %v473
        %v506 = vunpack.c.l.b16 %v474
        %v507 = vunpack.c.l.b16 %v475
        %v508 = vunpack.c.l.b16 %v476
        %v509 = vunpack.c.l.b16 %v477
        %v510 = vunpack.c.l.b16 %v478
        %v511 = vunpack.c.l.b16 %v479
        %v512 = vunpack.c.l.b16 %v480
        %v513 = vunpack.c.l.b16 %v481
        %v514 = vunpack.c.l.b16 %v482
        %v515 = vunpack.c.l.b16 %v483
        %v516 = vunpack.c.l.b16 %v484
        %v517 = vunpack.c.l.b16 %v485
        %v518 = vpack.c.b16 %v503, %v502
        %v519 = vpack.c.b16 %v505, %v504
        %v520 = vpack.c.b16 %v507, %v506
        %v521 = vpack.c.b16 %v509, %v508
        %v522 = vpack.c.b16 %v511, %v510
        %v523 = vpack.c.b16 %v513, %v512
        %v524 = vpack.c.b16 %v515, %v514
        %v525 = vpack.c.b16 %v517, %v516
        %534 = vmatprep.subr.bf16.mxu0 0
        %535 = vmatpush1.bf16.msra.mxu0 %v518
        %536 = vmatprep.subr.bf16.mxu0 0
        %537 = vmatpush1.bf16.msra.mxu0 %v519
        %538 = vmatprep.subr.bf16.mxu0 0
        %539 = vmatpush1.bf16.msra.mxu0 %v520
        %540 = vmatprep.subr.bf16.mxu0 0
        %541 = vmatpush1.bf16.msra.mxu0 %v521
        %542 = vmatprep.subr.bf16.mxu0 0
        %543 = vmatpush1.bf16.msra.mxu0 %v522
        %544 = vmatprep.subr.bf16.mxu0 0
        %545 = vmatpush1.bf16.msra.mxu0 %v523
        %546 = vmatprep.subr.bf16.mxu0 0
        %547 = vmatpush1.bf16.msra.mxu0 %v524
        %548 = vmatprep.subr.bf16.mxu0 0
        %549 = vmatpush1.bf16.msra.mxu0 %v525
        %550 = vmatprep.subr.bf16.mxu0 0
        %551 = vmatpush1.bf16.msra.mxu0 0
        %552 = vmatprep.subr.bf16.mxu0 0
        %553 = vmatpush1.bf16.msra.mxu0 0
        %554 = vmatprep.subr.bf16.mxu0 0
        %555 = vmatpush1.bf16.msra.mxu0 0
        %556 = vmatprep.subr.bf16.mxu0 0
        %557 = vmatpush1.bf16.msra.mxu0 0
        %558 = vmatprep.subr.bf16.mxu0 0
        %559 = vmatpush1.bf16.msra.mxu0 0
        %560 = vmatprep.subr.bf16.mxu0 0
        %561 = vmatpush1.bf16.msra.mxu0 0
        %562 = vmatprep.subr.bf16.mxu0 0
        %563 = vmatpush1.bf16.msra.mxu0 0
        %564 = vmatprep.subr.bf16.mxu0 0
        %565 = vmatpush1.bf16.msra.mxu0 0
        %566 = vmatprep.mubr.bf16.mxu0 0
        %567 = vmatmul.mubr.bf16.gmra.mrb[0].mxu0 %v469
        %v568 = vpop.f32.mrb[0].mxu0
        %v569 = vadd.f32 0.0, %v568
        %v570 = vpop.f32.mrb[0].mxu0
        %v571 = vpop.f32.mrb[0].mxu0
        %v572 = vadd.f32 0.0, %v571
        %v573 = vpop.f32.mrb[0].mxu0
        %574 = vdwg.mxu0
        %575 = vst [vmem:[%s243] sm:$0xff] %v569
        %576 = vst [vmem:[%s243 + $0x8] sm:$0xff] %v572
        %s577 = smul.u32 2, %s17
        %p578 = scmp.lt.s32.totalorder %s577, 3
        %s579 = scalar_select %p578, %s577, 3
        %s580 = smul.addr %s579, 8
        %s581 = scalar_lea.vmem %s4, %s580
        // Predicated region
        $region49: #{mlp_readout_forward.1} parent=35 // pred_check
          %p582 = pneg %p124
        $region50: #{mlp_readout_forward.1} parent=35 // pred_check_branch
          %584 = sbr.rel (%p582) target = $region52
        $region51: #{mlp_readout_forward.1} parent=35 // pred_region
          %s585 = smul.u32 2, %s17
        $region52: #{mlp_readout_forward.1} parent=35 // pred_fallthru
          _
      $region36: #{mlp_readout_forward.1} parent=5 // pred_fallthru
        _
      %p586 = scmp.le.s32.totalorder 2, %s12
      // Predicated region
      $region53: #{mlp_readout_forward.1} parent=5 // pred_check
        %p587 = pneg %p586
      $region54: #{mlp_readout_forward.1} parent=5 // pred_check_branch
        %589 = sbr.rel (%p587) target = $region56
      $region55: #{mlp_readout_forward.1} parent=5 // pred_region
        %s590 = ssub.s32 %s12, 2
        // Predicated region
        $region57: #{mlp_readout_forward.1} parent=55 // pred_check
          %p591 = pneg %p130
        $region58: #{mlp_readout_forward.1} parent=55 // pred_check_branch
          %593 = sbr.rel (%p591) target = $region60
        $region59: #{mlp_readout_forward.1} parent=55 // pred_region
          %s594 = smul.u32 2, %s18
          %p595 = scmp.lt.s32.totalorder %s594, 3
          %s596 = scalar_select %p595, %s594, 3
          %s597 = smul.addr %s596, 8
          %s598 = scalar_lea.vmem %s4, %s597
        $region60: #{mlp_readout_forward.1} parent=55 // pred_fallthru
          _
      $region56: #{mlp_readout_forward.1} parent=5 // pred_fallthru
        _
    $region6: #{mlp_readout_forward.1} parent=1 // loop_footer
      %s16 = sadd.s32 1, %s12
    $region7: #{mlp_readout_forward.1} parent=1 // loop_footer_branch
      %11 = sbr.rel target = $region3
    $region8: #{mlp_readout_forward.1} parent=1 // loop_exit
      _
    %599 = vsyncpa [#allocation3], 1
    %s600 = scalar_lea.sflag [#allocation3], 1
    %601 = vsyncpa %s600, 1
    %602 = vsyncpa [#allocation5], 1

</llo_original>
